<compile_context>
chip_gen: v7x
topology: tpu7x:2x2x1
jax: 0.10.0
libtpu: 0.0.40
codegen_flags: <defaults>
</compile_context>

<pallas_src>
import functools

import jax
import jax.numpy as jnp
from jax.experimental import pallas as pl
from jax.experimental.pallas import tpu as pltpu


def _round_up(x, m):
    return (x + m - 1) // m * m


_TK_CAP = 1024  # max K tile (f32 x-tile is tm*tk*4 bytes)
_TN_CAP = 1024  # max N tile
_TM_CAP = 512   # max M tile


def _pick_kn_tile(dim, cap):
    """Full dim if it fits under cap, else largest 128-multiple divisor <= cap."""
    if dim <= cap:
        return dim
    best = 128
    for c in range(256, cap + 1, 128):
        if dim % c == 0:
            best = c
    return best


def _pick_m_tile(M, cap=_TM_CAP):
    """Largest multiple-of-8 divisor of M that still leaves >= 2 M-tiles
    (keeps both v7x TensorCores busy); M itself when M <= 8."""
    if M <= 8:
        return M
    limit = min(cap, M // 2)
    best = 8
    for c in range(8, limit + 1, 8):
        if M % c == 0:
            best = c
    return best


def _apply_activation(y, activate):
    if activate == "relu":
        return jnp.maximum(y, 0.0)
    if activate == "sigmoid":
        return jax.nn.sigmoid(y)
    if activate == "tanh":
        return jnp.tanh(y)
    return y


def _make_fused_kernel(activate):
    # Single K block: o = act(dot(x, w) * scale + b).  No accumulator scratch,
    # no pl.when predicates, output store is a single lane-dense f32 write.
    def kernel(scale_ref, x_ref, w_ref, b_ref, o_ref):
        y = jnp.dot(
            x_ref[...].astype(jnp.bfloat16),
            w_ref[...],
            preferred_element_type=jnp.float32,
        )
        y = y * scale_ref[0] + b_ref[...]
        o_ref[...] = _apply_activation(y, activate).astype(o_ref.dtype)

    return kernel


def _make_reduction_kernel(activate):
    # K split across the innermost grid axis; the output BlockSpec ignores k,
    # so the f32 output block stays VMEM-resident across the reduction and we
    # accumulate directly into it (no separate scratch).
    def kernel(scale_ref, x_ref, w_ref, b_ref, o_ref):
        k = pl.program_id(2)

        @pl.when(k == 0)
        def _():
            o_ref[...] = jnp.zeros_like(o_ref)

        o_ref[...] += jnp.dot(
            x_ref[...].astype(jnp.bfloat16),
            w_ref[...],
            preferred_element_type=jnp.float32,
        )

        @pl.when(k == pl.num_programs(2) - 1)
        def _():
            y = o_ref[...] * scale_ref[0] + b_ref[...]
            o_ref[...] = _apply_activation(y, activate).astype(o_ref.dtype)

    return kernel


def prepare_fcnet_params(v, g, b):
    """One-time parameter preparation (hoisted out of the per-forward path).

    v: (out_size, in_size) f32   weight_norm "v" parameter (PyTorch layout)
    g: scalar                    weight_norm "g" parameter (dim=None -> scalar)
    b: (out_size,) f32           linear bias

    Returns (w_p, b_p, scale):
      w_p:   (K, N) bf16   pre-transposed, padded weight V.T
      b_p:   (1, N) f32    padded bias
      scale: (1,)   f32    g / ||V||_F (guarded against ||V|| == 0)
    """
    out_size, in_size = v.shape
    K = _round_up(in_size, 128)
    N = _round_up(out_size, 128)

    v32 = jnp.asarray(v, jnp.float32)
    norm = jnp.sqrt(jnp.sum(v32 * v32))
    g32 = jnp.asarray(g, jnp.float32)
    scale = (g32 / jnp.maximum(norm, jnp.finfo(jnp.float32).tiny)).reshape(1)

    w_p = jnp.pad(v32.T, ((0, K - in_size), (0, N - out_size))).astype(jnp.bfloat16)
    b_p = jnp.pad(jnp.asarray(b, jnp.float32), (0, N - out_size)).reshape(1, N)
    return w_p, b_p, scale


@functools.partial(jax.jit, static_argnames=("out_size", "activate"))
def fcnet_apply(x, w_p, b_p, scale, *, out_size, activate="relu"):
    """FCNet.forward (eval mode) using pre-prepared parameters."""
    act = activate.lower() if activate is not None else None

    B, in_size = x.shape
    K, N = w_p.shape
    M = _round_up(B, 8)

    tm = _pick_m_tile(M)
    tk = _pick_kn_tile(K, _TK_CAP)
    tn = _pick_kn_tile(N, _TN_CAP)

    # x stays f32 in HBM; bf16 cast happens in-kernel (hidden under the MXU).
    x_p = jnp.pad(jnp.asarray(x, jnp.float32), ((0, M - B), (0, K - in_size)))

    n_k = K // tk
    if n_k == 1:
        grid = (M // tm, N // tn)
        kernel = _make_fused_kernel(act)
        in_specs = [
            pl.BlockSpec((tm, tk), lambda i, j, s: (i, 0)),   # x
            pl.BlockSpec((tk, tn), lambda i, j, s: (0, j)),   # V.T (bf16)
            pl.BlockSpec((1, tn), lambda i, j, s: (0, j)),    # bias
        ]
        out_spec = pl.BlockSpec((tm, tn), lambda i, j, s: (i, j))
        dims = ("parallel", "parallel")
    else:
        grid = (M // tm, N // tn, n_k)  # reduction axis innermost (block reuse)
        kernel = _make_reduction_kernel(act)
        in_specs = [
            pl.BlockSpec((tm, tk), lambda i, j, k, s: (i, k)),
            pl.BlockSpec((tk, tn), lambda i, j, k, s: (k, j)),
            pl.BlockSpec((1, tn), lambda i, j, k, s: (0, j)),
        ]
        out_spec = pl.BlockSpec((tm, tn), lambda i, j, k, s: (i, j))
        dims = ("parallel", "parallel", "arbitrary")

    # VMEM budget derived from the actual tile footprint (double-buffered
    # inputs + output block); tile caps keep this well under v7x's 64 MiB.
    tile_bytes = 2 * (tm * tk * 4 + tk * tn * 2 + tn * 4) + 2 * tm * tn * 4
    vmem_limit = max(4 * 1024 * 1024, min(2 * tile_bytes, 64 * 1024 * 1024))

    cost = pl.CostEstimate(
        flops=2 * M * N * K,
        transcendentals=(M * N if act in ("sigmoid", "tanh") else 0),
        bytes_accessed=M * K * 4 + K * N * 2 + N * 4 + M * N * 4,
    )

    out = pl.pallas_call(
        kernel,
        out_shape=jax.ShapeDtypeStruct((M, N), jnp.float32),
        grid_spec=pltpu.PrefetchScalarGridSpec(
            num_scalar_prefetch=1,  # scale -> SMEM, passed first to the kernel
            grid=grid,
            in_specs=in_specs,
            out_specs=out_spec,
        ),
        compiler_params=pltpu.CompilerParams(
            dimension_semantics=dims,
            vmem_limit_bytes=vmem_limit,
        ),
        cost_estimate=cost,
    )(scale, x_p, w_p, b_p)

    if M == B and N == out_size:
        return out  # no padding was added -> no extra slice pass
    return out[:B, :out_size]


def fcnet_forward(x, v, g, b, activate="relu"):
    """Convenience wrapper: prepare params + apply (prefer caching the prep)."""
    w_p, b_p, scale = prepare_fcnet_params(v, g, b)
    return fcnet_apply(x, w_p, b_p, scale, out_size=v.shape[0], activate=activate)


def _reference(x, v, g, b, activate="relu", cast_bf16=False):
    norm = jnp.sqrt(jnp.sum(v ** 2))
    scale = g / norm
    if cast_bf16:
        x = x.astype(jnp.bfloat16).astype(jnp.float32)
        v = v.astype(jnp.bfloat16).astype(jnp.float32)
    y = jnp.dot(x, v.T, precision=jax.lax.Precision.HIGHEST) * scale + b
    return _apply_activation(y, activate)


def _run_case(key, B, in_size, out_size, activate):
    k_x, k_v, k_b = jax.random.split(key, 3)
    x = jax.random.normal(k_x, (B, in_size), dtype=jnp.float32)
    bound = 1.0 / (in_size ** 0.5)
    v = jax.random.uniform(k_v, (out_size, in_size), jnp.float32, -bound, bound)
    g = jnp.sqrt(jnp.sum(v ** 2))  # weight_norm init: W_eff == v at init
    b = jax.random.uniform(k_b, (out_size,), jnp.float32, -bound, bound)

    w_p, b_p, scale = prepare_fcnet_params(v, g, b)  # one-time prep
    out = fcnet_apply(x, w_p, b_p, scale, out_size=out_size, activate=activate)
    out = jax.block_until_ready(out)
    assert out.shape == (B, out_size)

    ref_bf16 = _reference(x, v, g, b, activate=activate, cast_bf16=True)
    assert jnp.allclose(out, ref_bf16, atol=2e-3, rtol=2e-3), (
        f"mismatch vs bf16 reference ({activate}, in={in_size})")
    ref_f32 = _reference(x, v, g, b, activate=activate, cast_bf16=False)
    assert jnp.allclose(out, ref_f32, atol=5e-2, rtol=5e-2), (
        f"mismatch vs f32 reference ({activate}, in={in_size})")
    return out


if __name__ == "__main__":
    key = jax.random.PRNGKey(0)
    k1, k2, k3 = jax.random.split(key, 3)

    # Small FCNet: fused single-K-block kernel path (grid = (2, 1)).
    _run_case(k1, B=32, in_size=64, out_size=48, activate="relu")

    # Sigmoid activation path (EUP transcendental in epilogue).
    _run_case(k2, B=32, in_size=64, out_size=48, activate="sigmoid")

    # Wider in_size: exercises the multi-K reduction kernel (K split, accumulate
    # directly into the VMEM-resident output block).
    _run_case(k3, B=32, in_size=1536, out_size=48, activate="relu")

    print("KERNEL_OK")
</pallas_src>

<mosaic_0001>
module attributes {stable_mosaic.version = 11 : i64} {
  func.func @kernel(%arg0: i32, %arg1: i32, %arg2: memref<1xf32, #tpu.memory_space<smem>>, %arg3: memref<16x128xf32, #tpu.memory_space<vmem>>, %arg4: memref<128x128xbf16, #tpu.memory_space<vmem>>, %arg5: memref<1x128xf32, #tpu.memory_space<vmem>>, %arg6: memref<16x128xf32, #tpu.memory_space<vmem>>) attributes {dimension_semantics = [#tpu.dimension_semantics<parallel>, #tpu.dimension_semantics<parallel>], iteration_bounds = array<i64: 2, 1>, scalar_prefetch = 1 : i64, scratch_operands = 0 : i64, tpu.core_type = #tpu.core_type<tc>, window_params = [{transform_indices = @transform_0, window_bounds = array<i64: 16, 128>}, {transform_indices = @transform_1, window_bounds = array<i64: 128, 128>}, {transform_indices = @transform_2, window_bounds = array<i64: 1, 128>}, {transform_indices = @transform_3, window_bounds = array<i64: 16, 128>}]} {
    %c0 = arith.constant 0 : index
    %c0_0 = arith.constant 0 : index
    %0 = vector.load %arg3[%c0, %c0_0] : memref<16x128xf32, #tpu.memory_space<vmem>>, vector<16x128xf32>
    %1 = arith.truncf %0 : vector<16x128xf32> to vector<16x128xbf16>
    %c0_1 = arith.constant 0 : index
    %c0_2 = arith.constant 0 : index
    %2 = vector.load %arg4[%c0_1, %c0_2] : memref<128x128xbf16, #tpu.memory_space<vmem>>, vector<128x128xbf16>
    %cst = arith.constant dense<0.000000e+00> : vector<16x128xf32>
    %3 = tpu.matmul %1, %2, %cst {dimension_numbers = #tpu.dot_dimension_numbers<[1], [0], [0], [1], [0, 0, 1, 1], [], []>} : vector<16x128xbf16>, vector<128x128xbf16>, vector<16x128xf32> -> vector<16x128xf32>
    %c0_3 = arith.constant 0 : index
    %4 = memref.load %arg2[%c0_3] : memref<1xf32, #tpu.memory_space<smem>>
    %5 = vector.broadcast %4 : f32 to vector<16x128xf32>
    %6 = arith.mulf %3, %5 : vector<16x128xf32>
    %c0_4 = arith.constant 0 : index
    %c0_5 = arith.constant 0 : index
    %7 = vector.load %arg5[%c0_4, %c0_5] : memref<1x128xf32, #tpu.memory_space<vmem>>, vector<1x128xf32>
    %8 = vector.broadcast %7 : vector<1x128xf32> to vector<16x128xf32>
    %9 = arith.addf %6, %8 : vector<16x128xf32>
    %cst_6 = arith.constant 0.000000e+00 : f32
    %10 = vector.broadcast %cst_6 : f32 to vector<16x128xf32>
    %11 = arith.maximumf %9, %10 : vector<16x128xf32>
    %c0_7 = arith.constant 0 : index
    %c0_8 = arith.constant 0 : index
    %12 = vector.load %arg6[%c0_7, %c0_8] : memref<16x128xf32, #tpu.memory_space<vmem>>, vector<16x128xf32>
    tpu.vector_store %arg6[%c0_7, %c0_8], %11 {strides = array<i32>} : memref<16x128xf32, #tpu.memory_space<vmem>>, vector<16x128xf32>,
    return
  }
  func.func @transform_0(%arg0: i32, %arg1: i32, %arg2: memref<1xf32, #tpu.memory_space<smem>>) -> (i32, i32) {
    %c0_i32 = arith.constant 0 : i32
    %c0_i32_0 = arith.constant 0 : i32
    return %arg0, %c0_i32 : i32, i32
  }
  func.func @transform_1(%arg0: i32, %arg1: i32, %arg2: memref<1xf32, #tpu.memory_space<smem>>) -> (i32, i32) {
    %c0_i32 = arith.constant 0 : i32
    %c0_i32_0 = arith.constant 0 : i32
    return %c0_i32, %arg1 : i32, i32
  }
  func.func @transform_2(%arg0: i32, %arg1: i32, %arg2: memref<1xf32, #tpu.memory_space<smem>>) -> (i32, i32) {
    %c0_i32 = arith.constant 0 : i32
    %c0_i32_0 = arith.constant 0 : i32
    return %c0_i32, %arg1 : i32, i32
  }
  func.func @transform_3(%arg0: i32, %arg1: i32, %arg2: memref<1xf32, #tpu.memory_space<smem>>) -> (i32, i32) {
    %c0_i32 = arith.constant 0 : i32
    return %arg0, %arg1 : i32, i32
  }
}

</mosaic_0001>

<llo_original>
// kernel: fcnet_apply.1
$region0: #{fcnet_apply.1}
  #allocation0 [shape = 'u32[]', space=smem, size = 0x4, offset = 0x4, fixed_abs, tag = 'smem constant byte address 0x4 - core index']
  #allocation1 [shape = 'u32[144,128]{1,0:T(1,128)}', space=vmem, size = 0x12000, scoped, tag = 'internal scratch']
  #allocation2 [shape = 's32[1]{0}', space=sflag, size = 0x4, scoped, tag = 'scoped memory for fcnet_apply.1']
  #allocation3 [shape = 'f32[1]{0:T(128)S(6)}', space=smem, size = 0x200, scoped, tag = 'prefetched SMEM operand 0']
  %s0 = inlined_call_operand.<no memory space> [shape: f32[1], index: 0, kind: input, shape index: {}]
  %s1 = inlined_call_operand.vmem [shape: f32[32,128], index: 1, kind: input, shape index: {}]
  %s2 = inlined_call_operand.vmem [shape: bf16[128,128], index: 2, kind: input, shape index: {}]
  %s3 = inlined_call_operand.vmem [shape: f32[1,128], index: 3, kind: input, shape index: {}]
  %s4 = inlined_call_operand.hbm [shape: f32[32,128], index: 4, kind: output, shape index: {}]
  %s5 = sld [smem:[#allocation0]]
  $region45: #{fcnet_apply.1} parent=0
    _
  %s7 = ssub.s32 1, %s5
  %s8 = scalar_select 0, %s7, %s5
  %9 = sst [smem:[#allocation3]] %s0
  $region1: #{fcnet_apply.1} parent=0
    #allocation4 [shape = 'u8[16384]{0}', space=vmem, size = 0x4000, scoped, tag = 'output window, operand 0']
    #allocation5 [shape = 's32[2]{0}', space=sflag, size = 0x8, scoped, tag = 'scoped memory for fcnet_apply.1']
    %10 = vsyncpa [#allocation5], 0
    %s11 = scalar_lea.sflag [#allocation5], 1
    %12 = vsyncpa %s11, 0
    loop: start=0, step=1, limit=4
    $region2: #{fcnet_apply.1} parent=1 // loop_pre_header
      _
    $region3: #{fcnet_apply.1} parent=1 // loop_header
      %s14 = sphi 0, %s18
      %p15 = scmp.ge.s32.totalorder %s14, 4
      %s21 = sphi 0, %s33
      %s22 = sphi 0, %s29
      %s23 = sphi 0, %s21
      %s24 = sphi 0, %s22
      %s25 = sphi 0, %s23
      %s26 = sphi 0, %s24
      %s36 = sphi 0, %s38
      %s39 = sphi 0, %s36
      %s40 = sphi 0, %s39
      %s56 = sphi 0, %s40
      %s62 = sphi 0, %s64
      %s65 = sphi 0, %s62
      %s66 = sphi 0, %s65
      %s82 = sphi 0, %s66
      %s88 = sphi 0, %s90
      %s91 = sphi 0, %s88
      %s92 = sphi 0, %s91
      %s108 = sphi 0, %s92
      %s116 = sphi 0, %s118
      %s119 = sphi 0, %s116
      %s120 = sphi 0, %s119
      %s136 = sphi 0, %s120
    $region4: #{fcnet_apply.1} parent=1 // loop_header_branch
      %17 = sbr.rel (%p15) target = $region8
    $region5: #{fcnet_apply.1} parent=1 // loop_body
      %s19 = ssub.s32 %s14, 1
      %s20 = ssub.s32 %s14, 2
      %s27 = sadd.s32 1, %s22
      %p28 = scmp.ge.s32.totalorder %s27, 1
      %s29 = scalar_select %p28, 0, %s27
      %s30 = sadd.s32 1, %s21
      %s31 = scalar_select %p28, %s30, %s21
      %p32 = scmp.ge.s32.totalorder %s31, 2
      %s33 = scalar_select %p32, 0, %s31
      %s34 = ssub.s32 %s21, %s33
      %p35 = scmp.eq.s32.totalorder %s34, 0
      %s37 = sadd.s32 %s36, 1
      %s38 = scalar_select %p35, %s36, %s37
      %p41 = pneg %p35
      %p42 = scmp.eq.s32.totalorder %s14, 1
      %p43 = por %p41, %p42
      %p44 = scmp.ne.s32.totalorder %s36, %s39
      %p45 = scmp.eq.s32.totalorder %s14, 0
      %p46 = por %p44, %p45
      %p47 = scmp.ne.s32.totalorder %s36, %s39
      %p48 = scmp.eq.s32.totalorder %s19, 1
      %p49 = por %p47, %p48
      %p50 = scmp.ne.s32.totalorder %s39, %s40
      %p51 = scmp.eq.s32.totalorder %s19, 0
      %p52 = por %p50, %p51
      %p53 = scmp.ne.s32.totalorder %s39, %s40
      %p54 = scmp.eq.s32.totalorder %s20, 1
      %p55 = por %p53, %p54
      %p57 = scmp.ne.s32.totalorder %s40, %s56
      %p58 = scmp.eq.s32.totalorder %s20, 0
      %p59 = por %p57, %p58
      %s60 = ssub.s32 %s22, %s29
      %p61 = scmp.eq.s32.totalorder %s60, 0
      %s63 = sadd.s32 %s62, 1
      %s64 = scalar_select %p61, %s62, %s63
      %p67 = pneg %p61
      %p68 = scmp.eq.s32.totalorder %s14, 1
      %p69 = por %p67, %p68
      %p70 = scmp.ne.s32.totalorder %s62, %s65
      %p71 = scmp.eq.s32.totalorder %s14, 0
      %p72 = por %p70, %p71
      %p73 = scmp.ne.s32.totalorder %s62, %s65
      %p74 = scmp.eq.s32.totalorder %s19, 1
      %p75 = por %p73, %p74
      %p76 = scmp.ne.s32.totalorder %s65, %s66
      %p77 = scmp.eq.s32.totalorder %s19, 0
      %p78 = por %p76, %p77
      %p79 = scmp.ne.s32.totalorder %s65, %s66
      %p80 = scmp.eq.s32.totalorder %s20, 1
      %p81 = por %p79, %p80
      %p83 = scmp.ne.s32.totalorder %s66, %s82
      %p84 = scmp.eq.s32.totalorder %s20, 0
      %p85 = por %p83, %p84
      %s86 = ssub.s32 %s22, %s29
      %p87 = scmp.eq.s32.totalorder %s86, 0
      %s89 = sadd.s32 %s88, 1
      %s90 = scalar_select %p87, %s88, %s89
      %p93 = pneg %p87
      %p94 = scmp.eq.s32.totalorder %s14, 1
      %p95 = por %p93, %p94
      %p96 = scmp.ne.s32.totalorder %s88, %s91
      %p97 = scmp.eq.s32.totalorder %s14, 0
      %p98 = por %p96, %p97
      %p99 = scmp.ne.s32.totalorder %s88, %s91
      %p100 = scmp.eq.s32.totalorder %s19, 1
      %p101 = por %p99, %p100
      %p102 = scmp.ne.s32.totalorder %s91, %s92
      %p103 = scmp.eq.s32.totalorder %s19, 0
      %p104 = por %p102, %p103
      %p105 = scmp.ne.s32.totalorder %s91, %s92
      %p106 = scmp.eq.s32.totalorder %s20, 1
      %p107 = por %p105, %p106
      %p109 = scmp.ne.s32.totalorder %s92, %s108
      %p110 = scmp.eq.s32.totalorder %s20, 0
      %p111 = por %p109, %p110
      %s112 = ssub.s32 %s21, %s33
      %s113 = ssub.s32 %s22, %s29
      %s114 = sor.u32 %s112, %s113
      %p115 = scmp.eq.s32.totalorder %s114, 0
      %s117 = sadd.s32 %s116, 1
      %s118 = scalar_select %p115, %s116, %s117
      %p121 = pneg %p115
      %p122 = scmp.eq.s32.totalorder %s14, 1
      %p123 = por %p121, %p122
      %p124 = scmp.ne.s32.totalorder %s116, %s119
      %p125 = scmp.eq.s32.totalorder %s14, 0
      %p126 = por %p124, %p125
      %p127 = scmp.ne.s32.totalorder %s116, %s119
      %p128 = scmp.eq.s32.totalorder %s19, 1
      %p129 = por %p127, %p128
      %p130 = scmp.ne.s32.totalorder %s119, %s120
      %p131 = scmp.eq.s32.totalorder %s19, 0
      %p132 = por %p130, %p131
      %p133 = scmp.ne.s32.totalorder %s119, %s120
      %p134 = scmp.eq.s32.totalorder %s20, 1
      %p135 = por %p133, %p134
      %p137 = scmp.ne.s32.totalorder %s120, %s136
      %p138 = scmp.eq.s32.totalorder %s20, 0
      %p139 = por %p137, %p138
      %p140 = scmp.le.s32.totalorder 1, %s14
      %p141 = scmp.lt.s32.totalorder %s14, 3
      %p142 = pnand %p140, %p141
      %p143 = pneg %p142
      // Predicated region
      $region9: #{fcnet_apply.1} parent=5 // pred_check
        _
      $region10: #{fcnet_apply.1} parent=5 // pred_check_branch
        %145 = sbr.rel (%p142) target = $region12
      $region11: #{fcnet_apply.1} parent=5 // pred_region
        %s146 = ssub.s32 %s14, 1
        // Predicated region
        $region13: #{fcnet_apply.1} parent=11 // pred_check
          %p147 = pneg %p78
        $region14: #{fcnet_apply.1} parent=11 // pred_check_branch
          %149 = sbr.rel (%p147) target = $region16
        $region15: #{fcnet_apply.1} parent=11 // pred_region
          %p150 = scmp.lt.s32.totalorder %s24, 0
          %s151 = scalar_select %p150, %s24, 0
          %s152 = smul.addr %s151, 4
          %s153 = scalar_lea.vmem %s2, %s152
        $region16: #{fcnet_apply.1} parent=11 // pred_fallthru
          _
        // Predicated region
        $region17: #{fcnet_apply.1} parent=11 // pred_check
          %p154 = pneg %p104
        $region18: #{fcnet_apply.1} parent=11 // pred_check_branch
          %156 = sbr.rel (%p154) target = $region20
        $region19: #{fcnet_apply.1} parent=11 // pred_region
          %p157 = scmp.lt.s32.totalorder %s24, 0
          %s158 = scalar_select %p157, %s24, 0
          %s159 = scalar_lea.vmem %s3, %s158
        $region20: #{fcnet_apply.1} parent=11 // pred_fallthru
          _
      $region12: #{fcnet_apply.1} parent=5 // pred_fallthru
        _
      %p160 = scmp.lt.s32.totalorder %s14, 2
      // Predicated region
      $region21: #{fcnet_apply.1} parent=5 // pred_check
        %p161 = pneg %p160
      $region22: #{fcnet_apply.1} parent=5 // pred_check_branch
        %163 = sbr.rel (%p161) target = $region24
      $region23: #{fcnet_apply.1} parent=5 // pred_region
        // Predicated region
        $region25: #{fcnet_apply.1} parent=23 // pred_check
          %p164 = pneg %p46
        $region26: #{fcnet_apply.1} parent=23 // pred_check_branch
          %166 = sbr.rel (%p164) target = $region28
        $region27: #{fcnet_apply.1} parent=23 // pred_region
          %s167 = smul.u32 2, %s21
          %p168 = scmp.lt.s32.totalorder %s167, 3
          %s169 = scalar_select %p168, %s167, 3
          %s170 = smul.addr %s169, 8
          %s171 = scalar_lea.vmem %s1, %s170
          %s172 = smul.u32 2, %s21
        $region28: #{fcnet_apply.1} parent=23 // pred_fallthru
          _
      $region24: #{fcnet_apply.1} parent=5 // pred_fallthru
        _
      %p173 = scmp.le.s32.totalorder 1, %s14
      %p174 = scmp.lt.s32.totalorder %s14, 3
      %p175 = pnand %p173, %p174
      %p176 = pneg %p175
      // Predicated region
      $region29: #{fcnet_apply.1} parent=5 // pred_check
        _
      $region30: #{fcnet_apply.1} parent=5 // pred_check_branch
        %178 = sbr.rel (%p175) target = $region32
      $region31: #{fcnet_apply.1} parent=5 // pred_region
        %s179 = ssub.s32 %s14, 1
        %s180 = smul.u32 2, %s23
        %p181 = scmp.lt.s32.totalorder %s180, 3
        %s182 = scalar_select %p181, %s180, 3
        %s183 = smul.addr %s182, 8
        %s184 = scalar_lea.vmem %s1, %s183
        %p185 = pneg %p52
        %p186 = pneg %p49
        %p187 = scmp.lt.s32.totalorder %s24, 0
        %s188 = scalar_select %p187, %s24, 0
        %s189 = smul.addr %s188, 4
        %s190 = scalar_lea.vmem %s2, %s189
        %p191 = pneg %p78
        %p192 = pneg %p75
        %p193 = scmp.lt.s32.totalorder %s24, 0
        %s194 = scalar_select %p193, %s24, 0
        %s195 = scalar_lea.vmem %s3, %s194
        %p196 = pneg %p104
        %p197 = pneg %p101
        %p198 = pneg %p132
        %p199 = pneg %p129
        %s200 = sand.u32 %s119, 1
        %s201 = scalar_lea.sflag [#allocation5], %s200
        %s202 = sand.u32 %s119, 1
        %s203 = smul.addr %s202, 16
        %s204 = scalar_lea.vmem [#allocation4], %s203
        %s205 = smul.u32 2, %s23
        %p206 = scmp.lt.s32.totalorder %s205, 3
        %s207 = scalar_select %p206, %s205, 3
        %s208 = smul.addr %s207, 8
        %s209 = scalar_lea.vmem %s1, %s208
        %s210 = smul.u32 2, %s23
        %p211 = scmp.lt.s32.totalorder %s24, 0
        %s212 = scalar_select %p211, %s24, 0
        %s213 = smul.addr %s212, 4
        %s214 = scalar_lea.vmem %s2, %s213
        %p215 = scmp.lt.s32.totalorder %s24, 0
        %s216 = scalar_select %p215, %s24, 0
        %s217 = scalar_lea.vmem %s3, %s216
        %s218 = smul.u32 2, %s23
        %v220 = vld [vmem:[%s209] sm:$0xff]
        %v221 = vld [vmem:[%s209 + $0x8] sm:$0xff]
        %v222 = vpack.c.bf16 %v221, %v220
        %v223 = vld [vmem:[%s214] sm:$0xf]
        %v224 = vld [vmem:[%s214 + $0x4] sm:$0xf]
        %v225 = vld [vmem:[%s214 + $0x8] sm:$0xf]
        %v226 = vld [vmem:[%s214 + $0xc] sm:$0xf]
        %v227 = vld [vmem:[%s214 + $0x10] sm:$0xf]
        %v228 = vld [vmem:[%s214 + $0x14] sm:$0xf]
        %v229 = vld [vmem:[%s214 + $0x18] sm:$0xf]
        %v230 = vld [vmem:[%s214 + $0x1c] sm:$0xf]
        %v231 = vld [vmem:[%s214 + $0x20] sm:$0xf]
        %v232 = vld [vmem:[%s214 + $0x24] sm:$0xf]
        %v233 = vld [vmem:[%s214 + $0x28] sm:$0xf]
        %v234 = vld [vmem:[%s214 + $0x2c] sm:$0xf]
        %v235 = vld [vmem:[%s214 + $0x30] sm:$0xf]
        %v236 = vld [vmem:[%s214 + $0x34] sm:$0xf]
        %v237 = vld [vmem:[%s214 + $0x38] sm:$0xf]
        %v238 = vld [vmem:[%s214 + $0x3c] sm:$0xf]
        %v255 = vunpack.c.l.b16 %v223
        %v256 = vunpack.c.l.b16 %v224
        %v257 = vunpack.c.l.b16 %v225
        %v258 = vunpack.c.l.b16 %v226
        %v259 = vunpack.c.l.b16 %v227
        %v260 = vunpack.c.l.b16 %v228
        %v261 = vunpack.c.l.b16 %v229
        %v262 = vunpack.c.l.b16 %v230
        %v263 = vunpack.c.l.b16 %v231
        %v264 = vunpack.c.l.b16 %v232
        %v265 = vunpack.c.l.b16 %v233
        %v266 = vunpack.c.l.b16 %v234
        %v267 = vunpack.c.l.b16 %v235
        %v268 = vunpack.c.l.b16 %v236
        %v269 = vunpack.c.l.b16 %v237
        %v270 = vunpack.c.l.b16 %v238
        %v271 = vpack.c.b16 %v256, %v255
        %v272 = vpack.c.b16 %v258, %v257
        %v273 = vpack.c.b16 %v260, %v259
        %v274 = vpack.c.b16 %v262, %v261
        %v275 = vpack.c.b16 %v264, %v263
        %v276 = vpack.c.b16 %v266, %v265
        %v277 = vpack.c.b16 %v268, %v267
        %v278 = vpack.c.b16 %v270, %v269
        %287 = vmatprep.subr.bf16.mxu0 0
        %288 = vmatpush1.bf16.msra.mxu0 %v271
        %289 = vmatprep.subr.bf16.mxu0 0
        %290 = vmatpush1.bf16.msra.mxu0 %v272
        %291 = vmatprep.subr.bf16.mxu0 0
        %292 = vmatpush1.bf16.msra.mxu0 %v273
        %293 = vmatprep.subr.bf16.mxu0 0
        %294 = vmatpush1.bf16.msra.mxu0 %v274
        %295 = vmatprep.subr.bf16.mxu0 0
        %296 = vmatpush1.bf16.msra.mxu0 %v275
        %297 = vmatprep.subr.bf16.mxu0 0
        %298 = vmatpush1.bf16.msra.mxu0 %v276
        %299 = vmatprep.subr.bf16.mxu0 0
        %300 = vmatpush1.bf16.msra.mxu0 %v277
        %301 = vmatprep.subr.bf16.mxu0 0
        %302 = vmatpush1.bf16.msra.mxu0 %v278
        %303 = vmatprep.subr.bf16.mxu0 0
        %304 = vmatpush1.bf16.msra.mxu0 0
        %305 = vmatprep.subr.bf16.mxu0 0
        %306 = vmatpush1.bf16.msra.mxu0 0
        %307 = vmatprep.subr.bf16.mxu0 0
        %308 = vmatpush1.bf16.msra.mxu0 0
        %309 = vmatprep.subr.bf16.mxu0 0
        %310 = vmatpush1.bf16.msra.mxu0 0
        %311 = vmatprep.subr.bf16.mxu0 0
        %312 = vmatpush1.bf16.msra.mxu0 0
        %313 = vmatprep.subr.bf16.mxu0 0
        %314 = vmatpush1.bf16.msra.mxu0 0
        %315 = vmatprep.subr.bf16.mxu0 0
        %316 = vmatpush1.bf16.msra.mxu0 0
        %317 = vmatprep.subr.bf16.mxu0 0
        %318 = vmatpush1.bf16.msra.mxu0 0
        %319 = vmatprep.mubr.bf16.mxu0 0
        %320 = vmatmul.mubr.bf16.gmra.mrb[0].mxu0 %v222
        %v321 = vpop.f32.mrb[0].mxu0
        %v322 = vadd.f32 0.0, %v321
        %v323 = vpop.f32.mrb[0].mxu0
        %v324 = vpop.f32.mrb[0].mxu0
        %v325 = vadd.f32 0.0, %v324
        %v326 = vpop.f32.mrb[0].mxu0
        %327 = vdwg.mxu0
        %s328 = sld [smem:[#allocation3]]
        %v329 = vstv %s328
        %v330 = vmul.f32 %v322, %v329
        %v331 = vmul.f32 %v325, %v329
        %v332 = vld [vmem:[%s217] sm:$0x1]
        %v334 = vlaneseq
        %v335 = vshrl.u32 %v334, 7
        %v336 = vsub.s32 0, %v335
        %v337 = vrot.slane %v332, %v336
        %v339 = vadd.f32 %v330, %v337
        %v340 = vadd.f32 %v331, %v337
        %v341 = vmax.f32 %v339, 0.0
        %v342 = vmax.f32 %v340, 0.0
        %343 = vst [vmem:[%s204] sm:$0xff] %v341
        %344 = vst [vmem:[%s204 + $0x8] sm:$0xff] %v342
        %s345 = sand.u32 %s119, 1
        %s346 = scalar_lea.sflag [#allocation5], %s345
        %s347 = sand.u32 %s119, 1
        %s348 = smul.addr %s347, 16
        %s349 = scalar_lea.vmem [#allocation4], %s348
        // Predicated region
        $region33: #{fcnet_apply.1} parent=31 // pred_check
          %p350 = pneg %p129
        $region34: #{fcnet_apply.1} parent=31 // pred_check_branch
          %352 = sbr.rel (%p350) target = $region36
        $region35: #{fcnet_apply.1} parent=31 // pred_region
          %s353 = smul.u32 2, %s23
          %s355 = ssub.s32 256, 256
          %356 = vsyncadd %s346, %s355
          %s357 = sadd.s32 %s24, %s353
          %s358 = smul.addr %s357, 128
          %s359 = scalar_lea.hbm %s4, %s358
          %s360 = sshll.u32 %s349, 4
          %s361 = int_to_ptr.vmem [resolvable:$true] %s360
          %366 = dma.vmem_to_hbm [thread:$0]  %s361, 256, %s359, %s346, 128, 128, 8
        $region36: #{fcnet_apply.1} parent=31 // pred_fallthru
          _
      $region32: #{fcnet_apply.1} parent=5 // pred_fallthru
        _
      %p367 = scmp.le.s32.totalorder 2, %s14
      // Predicated region
      $region37: #{fcnet_apply.1} parent=5 // pred_check
        %p368 = pneg %p367
      $region38: #{fcnet_apply.1} parent=5 // pred_check_branch
        %370 = sbr.rel (%p368) target = $region40
      $region39: #{fcnet_apply.1} parent=5 // pred_region
        %s371 = ssub.s32 %s14, 2
        // Predicated region
        $region41: #{fcnet_apply.1} parent=39 // pred_check
          %p372 = pneg %p135
        $region42: #{fcnet_apply.1} parent=39 // pred_check_branch
          %374 = sbr.rel (%p372) target = $region44
        $region43: #{fcnet_apply.1} parent=39 // pred_region
          %s375 = sand.u32 %s120, 1
          %s376 = scalar_lea.sflag [#allocation5], %s375
          %s377 = sand.u32 %s120, 1
          %s378 = smul.addr %s377, 16
          %s379 = scalar_lea.vmem [#allocation4], %s378
          %380 = dma.done %s376, 256
        $region44: #{fcnet_apply.1} parent=39 // pred_fallthru
          _
      $region40: #{fcnet_apply.1} parent=5 // pred_fallthru
        _
    $region6: #{fcnet_apply.1} parent=1 // loop_footer
      %s18 = sadd.s32 1, %s14
    $region7: #{fcnet_apply.1} parent=1 // loop_footer_branch
      %13 = sbr.rel target = $region3
    $region8: #{fcnet_apply.1} parent=1 // loop_exit
      _
    %381 = vsyncpa [#allocation5], 1
    %s382 = scalar_lea.sflag [#allocation5], 1
    %383 = vsyncpa %s382, 1

</llo_original>
